<compile_context>
chip_gen: v7x
topology: tpu7x:2x2x1
jax: 0.10.0
libtpu: 0.0.40
codegen_flags: <defaults>
</compile_context>

<pallas_src>
import functools
import math

import numpy as np
import jax
import jax.numpy as jnp
from jax.experimental import pallas as pl
from jax.experimental.pallas import tpu as pltpu


# ---------------------------------------------------------------------------
# Fused MHA kernel: single invocation over the whole batch.
# ---------------------------------------------------------------------------
def _mha_kernel(B, Sq, Sk, dq, dv, h_eff, hq, hk, hv,
                vlen_ref,                         # SMEM (B,) int32
                xq_ref,                           # (B*Sq, Din) f32
                xk_ref, xv_ref,                   # (B*Sk, Din) f32
                wqkv_ref, bqkv_ref,               # (Din, hq+hk+hv) bf16, (1, hq+hk+hv) f32
                wo_ref, bo_ref,                   # (hv, Dout) bf16,      (1, Dout) f32
                o_ref):                           # (B*Sq, Dout) f32
    inv_sqrt_dq = jnp.float32(1.0 / math.sqrt(dq))

    # --- fused Q/K/V projection: ONE lane-dense MXU matmul ------------------
    x_all = jnp.concatenate([xq_ref[...], xk_ref[...], xv_ref[...]], axis=0)
    proj = jnp.dot(x_all.astype(jnp.bfloat16), wqkv_ref[...],
                   preferred_element_type=jnp.float32) + bqkv_ref[...]

    nq = B * Sq
    nk = B * Sk
    # Diagonal blocks of the stacked projection (static, sublane-aligned rows).
    q_all = proj[:nq, :hq] * inv_sqrt_dq            # fold 1/sqrt(d) into Q
    k_all = proj[nq:nq + nk, hq:hq + hk]
    v_all = proj[nq + nk:, hq + hk:]

    # bf16 copies feed the MXU; softmax / mask math stays f32.
    q_mx = q_all.astype(jnp.bfloat16)
    k_mx = k_all.astype(jnp.bfloat16)
    v_mx = v_all.astype(jnp.bfloat16)

    col = jax.lax.broadcasted_iota(jnp.int32, (Sq, Sk), 1)

    # --- attention core: static batch x head loop (B*h_eff tiny matmuls) ----
    batch_outs = []
    for b in range(B):
        vlen = vlen_ref[b]                          # SMEM scalar read
        keep = col < vlen                           # (Sq, Sk)
        qb = q_mx[b * Sq:(b + 1) * Sq, :]
        kb = k_mx[b * Sk:(b + 1) * Sk, :]
        vb = v_mx[b * Sk:(b + 1) * Sk, :]

        head_outs = []
        for h in range(h_eff):
            qh = qb[:, h * dq:(h + 1) * dq]         # (Sq, dq)
            kh = kb[:, h * dq:(h + 1) * dq]         # (Sk, dq)
            vh = vb[:, h * dv:(h + 1) * dv]         # (Sk, dv)

            # Q @ K^T without materializing a transpose: contract last dims.
            scores = jax.lax.dot_general(
                qh, kh, (((1,), (1,)), ((), ())),
                preferred_element_type=jnp.float32)  # (Sq, Sk) f32
            scores = jnp.where(keep, scores, jnp.float32(-1e9))

            m = jnp.max(scores, axis=-1, keepdims=True)
            e = jnp.exp(scores - m)                  # f32
            s = jnp.sum(e, axis=-1, keepdims=True)   # f32

            ctx = jnp.dot(e.astype(jnp.bfloat16), vh,
                          preferred_element_type=jnp.float32)   # (Sq, dv)
            head_outs.append(ctx / s)                # exact division

        # Head-concatenated layout == exactly what W_o expects.
        batch_outs.append(jnp.concatenate(head_outs, axis=-1))  # (Sq, h_eff*dv)

    concat = jnp.concatenate(batch_outs, axis=0)     # (B*Sq, h_eff*dv)

    out = jnp.dot(concat.astype(jnp.bfloat16), wo_ref[...],
                  preferred_element_type=jnp.float32) + bo_ref[...]
    o_ref[...] = out.astype(o_ref.dtype)


# ---------------------------------------------------------------------------
# One-time parameter layout prep (off the hot path)
# ---------------------------------------------------------------------------
def prepare_params(params):
    """Transpose torch-style (Dout, Din) weights, fuse Q/K/V, cast to bf16."""
    wq_t = params["Wq"].T          # (Din, hq)
    wk_t = params["Wk"].T          # (Din, hk)
    wv_t = params["Wv"].T          # (Din, hv)
    return {
        "Wqkv": jnp.concatenate([wq_t, wk_t, wv_t], axis=1).astype(jnp.bfloat16),
        "bqkv": jnp.concatenate(
            [params["bq"], params["bk"], params["bv"]]).reshape(1, -1).astype(jnp.float32),
        "WoT": params["Wo"].T.astype(jnp.bfloat16),
        "bo": params["bo"].reshape(1, -1).astype(jnp.float32),
        "hq": int(wq_t.shape[1]),
        "hk": int(wk_t.shape[1]),
        "hv": int(wv_t.shape[1]),
    }


# ---------------------------------------------------------------------------
# Wrapper
# ---------------------------------------------------------------------------
def multi_head_attention(params_t, q, k, v, k_valid_lens):
    """Fused MHA forward. params_t: output of prepare_params()."""
    B, Sq, din_q = q.shape
    _, Sk, din_k = k.shape
    din_v = v.shape[2]
    assert din_q == din_k == din_v, "fused QKV projection needs a common input width"
    assert v.shape[1] == Sk

    # Reference quirk: per-head dims come from the *input* last dims.
    dq, dv = din_q, din_v
    hq, hk, hv = params_t["hq"], params_t["hk"], params_t["hv"]
    dout = params_t["WoT"].shape[1]
    assert hq % dq == 0 and hk % dq == 0 and hv % dv == 0, \
        "q_size*num_heads must be divisible by the input hidden size"
    h_eff = hq // dq
    assert hk // dq == h_eff and hv // dv == h_eff

    # Pure reshapes (no transposes) so the kernel sees flat row-major slabs.
    xq = q.reshape(B * Sq, din_q)
    xk = k.reshape(B * Sk, din_k)
    xv = v.reshape(B * Sk, din_v)

    kernel = functools.partial(_mha_kernel, B, Sq, Sk, dq, dv, h_eff, hq, hk, hv)

    out = pl.pallas_call(
        kernel,
        out_shape=jax.ShapeDtypeStruct((B * Sq, dout), jnp.float32),
        in_specs=[
            pl.BlockSpec(memory_space=pltpu.MemorySpace.SMEM),   # valid_lens
            pl.BlockSpec(memory_space=pltpu.MemorySpace.VMEM),   # xq
            pl.BlockSpec(memory_space=pltpu.MemorySpace.VMEM),   # xk
            pl.BlockSpec(memory_space=pltpu.MemorySpace.VMEM),   # xv
            pl.BlockSpec(memory_space=pltpu.MemorySpace.VMEM),   # Wqkv (bf16)
            pl.BlockSpec(memory_space=pltpu.MemorySpace.VMEM),   # bqkv (f32)
            pl.BlockSpec(memory_space=pltpu.MemorySpace.VMEM),   # WoT  (bf16)
            pl.BlockSpec(memory_space=pltpu.MemorySpace.VMEM),   # bo   (f32)
        ],
        out_specs=pl.BlockSpec(memory_space=pltpu.MemorySpace.VMEM),
        compiler_params=pltpu.CompilerParams(
            # Explicit budget (safe on v5e/v6e/v7x); re-derive when scaling
            # sequence length / hidden size (flash-tile Sk on v7x first).
            vmem_limit_bytes=32 * 1024 * 1024,
        ),
    )(k_valid_lens.astype(jnp.int32), xq, xk, xv,
      params_t["Wqkv"], params_t["bqkv"], params_t["WoT"], params_t["bo"])

    return out.reshape(B, Sq, dout)


# ---------------------------------------------------------------------------
# Reference (pure jnp, f32) for a sanity check
# ---------------------------------------------------------------------------
def reference_forward(params, q, k, v, k_valid_lens):
    def lin(x, w, b):
        return x @ w.T + b

    d_q_in, d_v_in = q.shape[-1], v.shape[-1]
    Q = lin(q, params["Wq"], params["bq"])
    K = lin(k, params["Wk"], params["bk"])
    V = lin(v, params["Wv"], params["bv"])
    B, Sq, Sk = Q.shape[0], Q.shape[1], K.shape[1]
    Q = Q.reshape(B, Sq, -1, d_q_in).transpose(0, 2, 1, 3)
    K = K.reshape(B, Sk, -1, d_q_in).transpose(0, 2, 1, 3)
    V = V.reshape(B, Sk, -1, d_v_in).transpose(0, 2, 1, 3)
    scores = jnp.einsum("bhqd,bhkd->bhqk", Q, K) / math.sqrt(Q.shape[-1])
    mask = jnp.arange(Sk)[None, None, None, :] < k_valid_lens[:, None, None, None]
    scores = jnp.where(mask, scores, -1e9)
    attn = jax.nn.softmax(scores, axis=-1)
    out = jnp.einsum("bhqk,bhkd->bhqd", attn, V)
    out = out.transpose(0, 2, 1, 3).reshape(B, Sq, -1)
    return lin(out, params["Wo"], params["bo"])


# ---------------------------------------------------------------------------
if __name__ == "__main__":
    # Module hyper-parameters (consistent with the reference reshape quirk).
    hidden_size = 32
    q_size = k_size = v_size = 16
    num_heads = 4          # -> effective attention heads = 64 // 32 = 2
    batch, seq = 2, 8

    key = jax.random.PRNGKey(0)
    ks = jax.random.split(key, 12)
    scale = 0.05
    params = {
        "Wq": scale * jax.random.normal(ks[0], (q_size * num_heads, hidden_size), jnp.float32),
        "bq": scale * jax.random.normal(ks[1], (q_size * num_heads,), jnp.float32),
        "Wk": scale * jax.random.normal(ks[2], (k_size * num_heads, hidden_size), jnp.float32),
        "bk": scale * jax.random.normal(ks[3], (k_size * num_heads,), jnp.float32),
        "Wv": scale * jax.random.normal(ks[4], (v_size * num_heads, hidden_size), jnp.float32),
        "bv": scale * jax.random.normal(ks[5], (v_size * num_heads,), jnp.float32),
        "Wo": scale * jax.random.normal(ks[6], (hidden_size, num_heads * v_size), jnp.float32),
        "bo": scale * jax.random.normal(ks[7], (hidden_size,), jnp.float32),
    }

    q = jax.random.normal(ks[8], (batch, seq, hidden_size), jnp.float32)
    k = jax.random.normal(ks[9], (batch, seq, hidden_size), jnp.float32)
    v = jax.random.normal(ks[10], (batch, seq, hidden_size), jnp.float32)
    k_valid_lens = jnp.array([5, 8], dtype=jnp.int32)

    params_t = prepare_params(params)          # one-time layout prep (off hot path)
    out = multi_head_attention(params_t, q, k, v, k_valid_lens)
    out = jax.block_until_ready(out)

    ref = reference_forward(params, q, k, v, k_valid_lens)
    # Tolerance accommodates bf16 MXU operands (f32 accumulation, f32 softmax);
    # a structural bug would miss by orders of magnitude more than this.
    np.testing.assert_allclose(np.asarray(out), np.asarray(ref), rtol=5e-2, atol=2e-2)

    print("KERNEL_OK")
</pallas_src>

<mosaic_0001>
module attributes {stable_mosaic.version = 11 : i64} {
  func.func @_mha_kernel(%arg0: memref<2xi32, #tpu.memory_space<smem>>, %arg1: memref<16x32xf32, #tpu.memory_space<vmem>>, %arg2: memref<16x32xf32, #tpu.memory_space<vmem>>, %arg3: memref<16x32xf32, #tpu.memory_space<vmem>>, %arg4: memref<32x192xbf16, #tpu.memory_space<vmem>>, %arg5: memref<1x192xf32, #tpu.memory_space<vmem>>, %arg6: memref<64x32xbf16, #tpu.memory_space<vmem>>, %arg7: memref<1x32xf32, #tpu.memory_space<vmem>>, %arg8: memref<16x32xf32, #tpu.memory_space<vmem>>) attributes {dimension_semantics = [], scalar_prefetch = 0 : i64, scratch_operands = 0 : i64, tpu.core_type = #tpu.core_type<tc>} {
    %c0 = arith.constant 0 : index
    %c0_0 = arith.constant 0 : index
    %0 = vector.load %arg1[%c0, %c0_0] : memref<16x32xf32, #tpu.memory_space<vmem>>, vector<16x32xf32>
    %c0_1 = arith.constant 0 : index
    %c0_2 = arith.constant 0 : index
    %1 = vector.load %arg2[%c0_1, %c0_2] : memref<16x32xf32, #tpu.memory_space<vmem>>, vector<16x32xf32>
    %c0_3 = arith.constant 0 : index
    %c0_4 = arith.constant 0 : index
    %2 = vector.load %arg3[%c0_3, %c0_4] : memref<16x32xf32, #tpu.memory_space<vmem>>, vector<16x32xf32>
    %3 = tpu.concatenate %0, %1, %2 in 0 : vector<16x32xf32>, vector<16x32xf32>, vector<16x32xf32> -> vector<48x32xf32>
    %4 = arith.truncf %3 : vector<48x32xf32> to vector<48x32xbf16>
    %c0_5 = arith.constant 0 : index
    %c0_6 = arith.constant 0 : index
    %5 = vector.load %arg4[%c0_5, %c0_6] : memref<32x192xbf16, #tpu.memory_space<vmem>>, vector<32x192xbf16>
    %cst = arith.constant dense<0.000000e+00> : vector<48x192xf32>
    %6 = tpu.matmul %4, %5, %cst {dimension_numbers = #tpu.dot_dimension_numbers<[1], [0], [0], [1], [0, 0, 1, 1], [], []>} : vector<48x32xbf16>, vector<32x192xbf16>, vector<48x192xf32> -> vector<48x192xf32>
    %c0_7 = arith.constant 0 : index
    %c0_8 = arith.constant 0 : index
    %7 = vector.load %arg5[%c0_7, %c0_8] : memref<1x192xf32, #tpu.memory_space<vmem>>, vector<1x192xf32>
    %8 = vector.broadcast %7 : vector<1x192xf32> to vector<48x192xf32>
    %9 = arith.addf %6, %8 : vector<48x192xf32>
    %10 = vector.extract_strided_slice %9 {offsets = [0, 0], sizes = [16, 64], strides = [1, 1]} : vector<48x192xf32> to vector<16x64xf32>
    %cst_9 = arith.constant 0.176776692 : f32
    %11 = vector.broadcast %cst_9 : f32 to vector<16x64xf32>
    %12 = arith.mulf %10, %11 : vector<16x64xf32>
    %13 = vector.extract_strided_slice %9 {offsets = [16, 64], sizes = [16, 64], strides = [1, 1]} : vector<48x192xf32> to vector<16x64xf32>
    %14 = vector.extract_strided_slice %9 {offsets = [32, 128], sizes = [16, 64], strides = [1, 1]} : vector<48x192xf32> to vector<16x64xf32>
    %15 = arith.truncf %12 : vector<16x64xf32> to vector<16x64xbf16>
    %16 = arith.truncf %13 : vector<16x64xf32> to vector<16x64xbf16>
    %17 = arith.truncf %14 : vector<16x64xf32> to vector<16x64xbf16>
    %18 = tpu.iota {dimensions = array<i32: 1>} : vector<8x8xi32>
    %c0_10 = arith.constant 0 : index
    %19 = memref.load %arg0[%c0_10] : memref<2xi32, #tpu.memory_space<smem>>
    %20 = vector.broadcast %19 : i32 to vector<8x8xi32>
    %21 = arith.cmpi slt, %18, %20 : vector<8x8xi32>
    %22 = vector.extract_strided_slice %15 {offsets = [0, 0], sizes = [8, 64], strides = [1, 1]} : vector<16x64xbf16> to vector<8x64xbf16>
    %23 = vector.extract_strided_slice %16 {offsets = [0, 0], sizes = [8, 64], strides = [1, 1]} : vector<16x64xbf16> to vector<8x64xbf16>
    %24 = vector.extract_strided_slice %17 {offsets = [0, 0], sizes = [8, 64], strides = [1, 1]} : vector<16x64xbf16> to vector<8x64xbf16>
    %25 = vector.extract_strided_slice %22 {offsets = [0, 0], sizes = [8, 32], strides = [1, 1]} : vector<8x64xbf16> to vector<8x32xbf16>
    %26 = vector.extract_strided_slice %23 {offsets = [0, 0], sizes = [8, 32], strides = [1, 1]} : vector<8x64xbf16> to vector<8x32xbf16>
    %27 = vector.extract_strided_slice %24 {offsets = [0, 0], sizes = [8, 32], strides = [1, 1]} : vector<8x64xbf16> to vector<8x32xbf16>
    %cst_11 = arith.constant dense<0.000000e+00> : vector<8x8xf32>
    %28 = tpu.matmul %25, %26, %cst_11 {dimension_numbers = #tpu.dot_dimension_numbers<[1], [1], [0], [0], [0, 0, 1, 0], [], []>} : vector<8x32xbf16>, vector<8x32xbf16>, vector<8x8xf32> -> vector<8x8xf32>
    %cst_12 = arith.constant -1.000000e+09 : f32
    %29 = vector.broadcast %cst_12 : f32 to vector<8x8xf32>
    %30 = arith.select %21, %28, %29 : vector<8x8xi1>, vector<8x8xf32>
    %cst_13 = arith.constant dense<0xFF800000> : vector<8xf32>
    %31 = vector.multi_reduction <maximumf>, %30, %cst_13 [1] : vector<8x8xf32> to vector<8xf32>
    %32 = vector.shape_cast %31 : vector<8xf32> to vector<8x1xf32>
    %33 = vector.broadcast %32 : vector<8x1xf32> to vector<8x8xf32>
    %34 = arith.subf %30, %33 : vector<8x8xf32>
    %35 = math.exp %34 : vector<8x8xf32>
    %cst_14 = arith.constant dense<0.000000e+00> : vector<8xf32>
    %36 = vector.multi_reduction <add>, %35, %cst_14 [1] : vector<8x8xf32> to vector<8xf32>
    %37 = vector.shape_cast %36 : vector<8xf32> to vector<8x1xf32>
    %38 = arith.truncf %35 : vector<8x8xf32> to vector<8x8xbf16>
    %cst_15 = arith.constant dense<0.000000e+00> : vector<8x32xf32>
    %39 = tpu.matmul %38, %27, %cst_15 {dimension_numbers = #tpu.dot_dimension_numbers<[1], [0], [0], [1], [0, 0, 1, 1], [], []>} : vector<8x8xbf16>, vector<8x32xbf16>, vector<8x32xf32> -> vector<8x32xf32>
    %40 = vector.broadcast %37 : vector<8x1xf32> to vector<8x32xf32>
    %41 = arith.divf %39, %40 : vector<8x32xf32>
    %42 = vector.extract_strided_slice %22 {offsets = [0, 32], sizes = [8, 32], strides = [1, 1]} : vector<8x64xbf16> to vector<8x32xbf16>
    %43 = vector.extract_strided_slice %23 {offsets = [0, 32], sizes = [8, 32], strides = [1, 1]} : vector<8x64xbf16> to vector<8x32xbf16>
    %44 = vector.extract_strided_slice %24 {offsets = [0, 32], sizes = [8, 32], strides = [1, 1]} : vector<8x64xbf16> to vector<8x32xbf16>
    %cst_16 = arith.constant dense<0.000000e+00> : vector<8x8xf32>
    %45 = tpu.matmul %42, %43, %cst_16 {dimension_numbers = #tpu.dot_dimension_numbers<[1], [1], [0], [0], [0, 0, 1, 0], [], []>} : vector<8x32xbf16>, vector<8x32xbf16>, vector<8x8xf32> -> vector<8x8xf32>
    %cst_17 = arith.constant -1.000000e+09 : f32
    %46 = vector.broadcast %cst_17 : f32 to vector<8x8xf32>
    %47 = arith.select %21, %45, %46 : vector<8x8xi1>, vector<8x8xf32>
    %cst_18 = arith.constant dense<0xFF800000> : vector<8xf32>
    %48 = vector.multi_reduction <maximumf>, %47, %cst_18 [1] : vector<8x8xf32> to vector<8xf32>
    %49 = vector.shape_cast %48 : vector<8xf32> to vector<8x1xf32>
    %50 = vector.broadcast %49 : vector<8x1xf32> to vector<8x8xf32>
    %51 = arith.subf %47, %50 : vector<8x8xf32>
    %52 = math.exp %51 : vector<8x8xf32>
    %cst_19 = arith.constant dense<0.000000e+00> : vector<8xf32>
    %53 = vector.multi_reduction <add>, %52, %cst_19 [1] : vector<8x8xf32> to vector<8xf32>
    %54 = vector.shape_cast %53 : vector<8xf32> to vector<8x1xf32>
    %55 = arith.truncf %52 : vector<8x8xf32> to vector<8x8xbf16>
    %cst_20 = arith.constant dense<0.000000e+00> : vector<8x32xf32>
    %56 = tpu.matmul %55, %44, %cst_20 {dimension_numbers = #tpu.dot_dimension_numbers<[1], [0], [0], [1], [0, 0, 1, 1], [], []>} : vector<8x8xbf16>, vector<8x32xbf16>, vector<8x32xf32> -> vector<8x32xf32>
    %57 = vector.broadcast %54 : vector<8x1xf32> to vector<8x32xf32>
    %58 = arith.divf %56, %57 : vector<8x32xf32>
    %59 = tpu.concatenate %41, %58 in 1 : vector<8x32xf32>, vector<8x32xf32> -> vector<8x64xf32>
    %c1 = arith.constant 1 : index
    %60 = memref.load %arg0[%c1] : memref<2xi32, #tpu.memory_space<smem>>
    %61 = vector.broadcast %60 : i32 to vector<8x8xi32>
    %62 = arith.cmpi slt, %18, %61 : vector<8x8xi32>
    %63 = vector.extract_strided_slice %15 {offsets = [8, 0], sizes = [8, 64], strides = [1, 1]} : vector<16x64xbf16> to vector<8x64xbf16>
    %64 = vector.extract_strided_slice %16 {offsets = [8, 0], sizes = [8, 64], strides = [1, 1]} : vector<16x64xbf16> to vector<8x64xbf16>
    %65 = vector.extract_strided_slice %17 {offsets = [8, 0], sizes = [8, 64], strides = [1, 1]} : vector<16x64xbf16> to vector<8x64xbf16>
    %66 = vector.extract_strided_slice %63 {offsets = [0, 0], sizes = [8, 32], strides = [1, 1]} : vector<8x64xbf16> to vector<8x32xbf16>
    %67 = vector.extract_strided_slice %64 {offsets = [0, 0], sizes = [8, 32], strides = [1, 1]} : vector<8x64xbf16> to vector<8x32xbf16>
    %68 = vector.extract_strided_slice %65 {offsets = [0, 0], sizes = [8, 32], strides = [1, 1]} : vector<8x64xbf16> to vector<8x32xbf16>
    %cst_21 = arith.constant dense<0.000000e+00> : vector<8x8xf32>
    %69 = tpu.matmul %66, %67, %cst_21 {dimension_numbers = #tpu.dot_dimension_numbers<[1], [1], [0], [0], [0, 0, 1, 0], [], []>} : vector<8x32xbf16>, vector<8x32xbf16>, vector<8x8xf32> -> vector<8x8xf32>
    %cst_22 = arith.constant -1.000000e+09 : f32
    %70 = vector.broadcast %cst_22 : f32 to vector<8x8xf32>
    %71 = arith.select %62, %69, %70 : vector<8x8xi1>, vector<8x8xf32>
    %cst_23 = arith.constant dense<0xFF800000> : vector<8xf32>
    %72 = vector.multi_reduction <maximumf>, %71, %cst_23 [1] : vector<8x8xf32> to vector<8xf32>
    %73 = vector.shape_cast %72 : vector<8xf32> to vector<8x1xf32>
    %74 = vector.broadcast %73 : vector<8x1xf32> to vector<8x8xf32>
    %75 = arith.subf %71, %74 : vector<8x8xf32>
    %76 = math.exp %75 : vector<8x8xf32>
    %cst_24 = arith.constant dense<0.000000e+00> : vector<8xf32>
    %77 = vector.multi_reduction <add>, %76, %cst_24 [1] : vector<8x8xf32> to vector<8xf32>
    %78 = vector.shape_cast %77 : vector<8xf32> to vector<8x1xf32>
    %79 = arith.truncf %76 : vector<8x8xf32> to vector<8x8xbf16>
    %cst_25 = arith.constant dense<0.000000e+00> : vector<8x32xf32>
    %80 = tpu.matmul %79, %68, %cst_25 {dimension_numbers = #tpu.dot_dimension_numbers<[1], [0], [0], [1], [0, 0, 1, 1], [], []>} : vector<8x8xbf16>, vector<8x32xbf16>, vector<8x32xf32> -> vector<8x32xf32>
    %81 = vector.broadcast %78 : vector<8x1xf32> to vector<8x32xf32>
    %82 = arith.divf %80, %81 : vector<8x32xf32>
    %83 = vector.extract_strided_slice %63 {offsets = [0, 32], sizes = [8, 32], strides = [1, 1]} : vector<8x64xbf16> to vector<8x32xbf16>
    %84 = vector.extract_strided_slice %64 {offsets = [0, 32], sizes = [8, 32], strides = [1, 1]} : vector<8x64xbf16> to vector<8x32xbf16>
    %85 = vector.extract_strided_slice %65 {offsets = [0, 32], sizes = [8, 32], strides = [1, 1]} : vector<8x64xbf16> to vector<8x32xbf16>
    %cst_26 = arith.constant dense<0.000000e+00> : vector<8x8xf32>
    %86 = tpu.matmul %83, %84, %cst_26 {dimension_numbers = #tpu.dot_dimension_numbers<[1], [1], [0], [0], [0, 0, 1, 0], [], []>} : vector<8x32xbf16>, vector<8x32xbf16>, vector<8x8xf32> -> vector<8x8xf32>
    %cst_27 = arith.constant -1.000000e+09 : f32
    %87 = vector.broadcast %cst_27 : f32 to vector<8x8xf32>
    %88 = arith.select %62, %86, %87 : vector<8x8xi1>, vector<8x8xf32>
    %cst_28 = arith.constant dense<0xFF800000> : vector<8xf32>
    %89 = vector.multi_reduction <maximumf>, %88, %cst_28 [1] : vector<8x8xf32> to vector<8xf32>
    %90 = vector.shape_cast %89 : vector<8xf32> to vector<8x1xf32>
    %91 = vector.broadcast %90 : vector<8x1xf32> to vector<8x8xf32>
    %92 = arith.subf %88, %91 : vector<8x8xf32>
    %93 = math.exp %92 : vector<8x8xf32>
    %cst_29 = arith.constant dense<0.000000e+00> : vector<8xf32>
    %94 = vector.multi_reduction <add>, %93, %cst_29 [1] : vector<8x8xf32> to vector<8xf32>
    %95 = vector.shape_cast %94 : vector<8xf32> to vector<8x1xf32>
    %96 = arith.truncf %93 : vector<8x8xf32> to vector<8x8xbf16>
    %cst_30 = arith.constant dense<0.000000e+00> : vector<8x32xf32>
    %97 = tpu.matmul %96, %85, %cst_30 {dimension_numbers = #tpu.dot_dimension_numbers<[1], [0], [0], [1], [0, 0, 1, 1], [], []>} : vector<8x8xbf16>, vector<8x32xbf16>, vector<8x32xf32> -> vector<8x32xf32>
    %98 = vector.broadcast %95 : vector<8x1xf32> to vector<8x32xf32>
    %99 = arith.divf %97, %98 : vector<8x32xf32>
    %100 = tpu.concatenate %82, %99 in 1 : vector<8x32xf32>, vector<8x32xf32> -> vector<8x64xf32>
    %101 = tpu.concatenate %59, %100 in 0 : vector<8x64xf32>, vector<8x64xf32> -> vector<16x64xf32>
    %102 = arith.truncf %101 : vector<16x64xf32> to vector<16x64xbf16>
    %c0_31 = arith.constant 0 : index
    %c0_32 = arith.constant 0 : index
    %103 = vector.load %arg6[%c0_31, %c0_32] : memref<64x32xbf16, #tpu.memory_space<vmem>>, vector<64x32xbf16>
    %cst_33 = arith.constant dense<0.000000e+00> : vector<16x32xf32>
    %104 = tpu.matmul %102, %103, %cst_33 {dimension_numbers = #tpu.dot_dimension_numbers<[1], [0], [0], [1], [0, 0, 1, 1], [], []>} : vector<16x64xbf16>, vector<64x32xbf16>, vector<16x32xf32> -> vector<16x32xf32>
    %c0_34 = arith.constant 0 : index
    %c0_35 = arith.constant 0 : index
    %105 = vector.load %arg7[%c0_34, %c0_35] : memref<1x32xf32, #tpu.memory_space<vmem>>, vector<1x32xf32>
    %106 = vector.broadcast %105 : vector<1x32xf32> to vector<16x32xf32>
    %107 = arith.addf %104, %106 : vector<16x32xf32>
    %c0_36 = arith.constant 0 : index
    %c0_37 = arith.constant 0 : index
    %108 = vector.load %arg8[%c0_36, %c0_37] : memref<16x32xf32, #tpu.memory_space<vmem>>, vector<16x32xf32>
    tpu.vector_store %arg8[%c0_36, %c0_37], %107 {strides = array<i32>} : memref<16x32xf32, #tpu.memory_space<vmem>>, vector<16x32xf32>,
    return
  }
}

</mosaic_0001>

<llo_original>
// kernel: tpu_custom_call.1
$region0: #{tpu_custom_call.1}
  #allocation0 [shape = 'u32[]', space=smem, size = 0x4, offset = 0x4, fixed_abs, tag = 'smem constant byte address 0x4 - core index']
  #allocation1 [shape = 'u32[144,128]{1,0:T(1,128)}', space=vmem, size = 0x12000, scoped, tag = 'internal scratch']
  %s0 = inlined_call_operand.vmem [shape: s32[2], index: 0, kind: input, shape index: {}]
  %s1 = inlined_call_operand.vmem [shape: f32[16,32], index: 1, kind: input, shape index: {}]
  %s2 = inlined_call_operand.hbm [shape: f32[16,32], index: 2, kind: input, shape index: {}]
  %s3 = inlined_call_operand.hbm [shape: f32[16,32], index: 3, kind: input, shape index: {}]
  %s4 = inlined_call_operand.vmem [shape: bf16[32,192], index: 4, kind: input, shape index: {}]
  %s5 = inlined_call_operand.vmem [shape: f32[1,192], index: 5, kind: input, shape index: {}]
  %s6 = inlined_call_operand.vmem [shape: bf16[64,32], index: 6, kind: input, shape index: {}]
  %s7 = inlined_call_operand.vmem [shape: f32[1,32], index: 7, kind: input, shape index: {}]
  %s8 = inlined_call_operand.hbm [shape: f32[16,32], index: 8, kind: output, shape index: {}]
  %s9 = sld [smem:[#allocation0]]
  $region54: #{tpu_custom_call.1} parent=0
    _
  %s11 = ssub.s32 1, %s9
  %s12 = scalar_select 0, %s11, %s9
  $region1: #{tpu_custom_call.1} parent=0
    #allocation2 [shape = 'u8[512]{0}', space=smem, size = 0x200, scoped, tag = 'input window, operand 0, single buffered']
    #allocation3 [shape = 's32[1]{0}', space=sflag, size = 0x4, scoped, tag = 'scoped memory for tpu_custom_call.1']
    #allocation4 [shape = 's32[1]{0}', space=sflag, size = 0x4, scoped, tag = 'scoped memory for tpu_custom_call.1']
    #allocation5 [shape = 's32[1]{0}', space=sflag, size = 0x4, scoped, tag = 'scoped memory for tpu_custom_call.1']
    #allocation6 [shape = 'u8[8192]{0}', space=vmem, size = 0x2000, scoped, tag = 'input window, operand 2, single buffered']
    #allocation7 [shape = 'u8[8192]{0}', space=vmem, size = 0x2000, scoped, tag = 'input window, operand 3, single buffered']
    #allocation8 [shape = 's32[1]{0}', space=sflag, size = 0x4, scoped, tag = 'scoped memory for tpu_custom_call.1']
    #allocation9 [shape = 'u8[8192]{0}', space=vmem, size = 0x2000, scoped, tag = 'output window, operand 0, single buffered']
    %13 = vsyncpa [#allocation5], 0
    %14 = vsyncpa [#allocation3], 0
    %15 = vsyncpa [#allocation8], 0
    %16 = vsyncpa [#allocation4], 0
    // Predicated region
    $region2: #{tpu_custom_call.1} parent=1 // pred_check
      _
    $region3: #{tpu_custom_call.1} parent=1 // pred_check_branch
      %18 = sbr.rel (0) target = $region5
    $region4: #{tpu_custom_call.1} parent=1 // pred_region
      %s20 = ssub.s32 16, 16
      %21 = vsyncadd [#allocation5], %s20
      %s23 = sshll.u32 %s0, 4
      %s24 = int_to_ptr.vmem [resolvable:$true] %s23
      %26 = dma.vmem_to_smem %s24, 16, [#allocation2], [#allocation5]
    $region5: #{tpu_custom_call.1} parent=1 // pred_fallthru
      _
    // Predicated region
    $region6: #{tpu_custom_call.1} parent=1 // pred_check
      _
    $region7: #{tpu_custom_call.1} parent=1 // pred_check_branch
      %28 = sbr.rel (0) target = $region9
    $region8: #{tpu_custom_call.1} parent=1 // pred_region
      _
    $region9: #{tpu_custom_call.1} parent=1 // pred_fallthru
      _
    // Predicated region
    $region10: #{tpu_custom_call.1} parent=1 // pred_check
      _
    $region11: #{tpu_custom_call.1} parent=1 // pred_check_branch
      %30 = sbr.rel (0) target = $region13
    $region12: #{tpu_custom_call.1} parent=1 // pred_region
      %s32 = ssub.s32 256, 256
      %33 = vsyncadd [#allocation3], %s32
      %s34 = sshll.u32 [#allocation6], 4
      %s35 = int_to_ptr.vmem [resolvable:$true] %s34
      %40 = dma.hbm_to_vmem [thread:$0]  %s2, 256, %s35, [#allocation3], 128, 128, 8
    $region13: #{tpu_custom_call.1} parent=1 // pred_fallthru
      _
    // Predicated region
    $region14: #{tpu_custom_call.1} parent=1 // pred_check
      _
    $region15: #{tpu_custom_call.1} parent=1 // pred_check_branch
      %42 = sbr.rel (0) target = $region17
    $region16: #{tpu_custom_call.1} parent=1 // pred_region
      %s44 = ssub.s32 256, 256
      %45 = vsyncadd [#allocation8], %s44
      %s46 = sshll.u32 [#allocation7], 4
      %s47 = int_to_ptr.vmem [resolvable:$true] %s46
      %52 = dma.hbm_to_vmem [thread:$0]  %s3, 256, %s47, [#allocation8], 128, 128, 8
    $region17: #{tpu_custom_call.1} parent=1 // pred_fallthru
      _
    // Predicated region
    $region18: #{tpu_custom_call.1} parent=1 // pred_check
      _
    $region19: #{tpu_custom_call.1} parent=1 // pred_check_branch
      %54 = sbr.rel (0) target = $region21
    $region20: #{tpu_custom_call.1} parent=1 // pred_region
      _
    $region21: #{tpu_custom_call.1} parent=1 // pred_fallthru
      _
    // Predicated region
    $region22: #{tpu_custom_call.1} parent=1 // pred_check
      _
    $region23: #{tpu_custom_call.1} parent=1 // pred_check_branch
      %56 = sbr.rel (0) target = $region25
    $region24: #{tpu_custom_call.1} parent=1 // pred_region
      _
    $region25: #{tpu_custom_call.1} parent=1 // pred_fallthru
      _
    // Predicated region
    $region26: #{tpu_custom_call.1} parent=1 // pred_check
      _
    $region27: #{tpu_custom_call.1} parent=1 // pred_check_branch
      %58 = sbr.rel (0) target = $region29
    $region28: #{tpu_custom_call.1} parent=1 // pred_region
      _
    $region29: #{tpu_custom_call.1} parent=1 // pred_fallthru
      _
    // Predicated region
    $region30: #{tpu_custom_call.1} parent=1 // pred_check
      _
    $region31: #{tpu_custom_call.1} parent=1 // pred_check_branch
      %60 = sbr.rel (0) target = $region33
    $region32: #{tpu_custom_call.1} parent=1 // pred_region
      _
    $region33: #{tpu_custom_call.1} parent=1 // pred_fallthru
      _
    // Predicated region
    $region34: #{tpu_custom_call.1} parent=1 // pred_check
      _
    $region35: #{tpu_custom_call.1} parent=1 // pred_check_branch
      %62 = sbr.rel (0) target = $region37
    $region36: #{tpu_custom_call.1} parent=1 // pred_region
      %63 = dma.done [#allocation5], 16
    $region37: #{tpu_custom_call.1} parent=1 // pred_fallthru
      _
    // Predicated region
    $region38: #{tpu_custom_call.1} parent=1 // pred_check
      _
    $region39: #{tpu_custom_call.1} parent=1 // pred_check_branch
      %65 = sbr.rel (0) target = $region41
    $region40: #{tpu_custom_call.1} parent=1 // pred_region
      %66 = dma.done [#allocation3], 256
    $region41: #{tpu_custom_call.1} parent=1 // pred_fallthru
      _
    // Predicated region
    $region42: #{tpu_custom_call.1} parent=1 // pred_check
      _
    $region43: #{tpu_custom_call.1} parent=1 // pred_check_branch
      %68 = sbr.rel (0) target = $region45
    $region44: #{tpu_custom_call.1} parent=1 // pred_region
      %69 = dma.done [#allocation8], 256
    $region45: #{tpu_custom_call.1} parent=1 // pred_fallthru
      _
    %70 = sfence
    %v72 = vld [vmem:[%s1] sm:$0xff]
    %v73 = vld [vmem:[%s1 + $0x8] sm:$0xff]
    %v74 = vld [vmem:[#allocation6] sm:$0xff]
    %v75 = vld [vmem:[#allocation6 + $0x8] sm:$0xff]
    %v76 = vld [vmem:[#allocation7] sm:$0xff]
    %v77 = vld [vmem:[#allocation7 + $0x8] sm:$0xff]
    %v78 = vpack.c.bf16 %v73, %v72
    %v79 = vpack.c.bf16 %v75, %v74
    %v80 = vpack.c.bf16 %v77, %v76
    %v81 = vld [vmem:[%s4] sm:$0xff]
    %v82 = vld [vmem:[%s4 + $0x8] sm:$0xff]
    %v83 = vld [vmem:[%s4 + $0x10] sm:$0xff]
    %v84 = vld [vmem:[%s4 + $0x18] sm:$0xff]
    %v85 = vld [vmem:[%s5] sm:$0x3]
    %v87 = vlaneseq
    %v88 = vshrl.u32 %v87, 7
    %v89 = vsub.s32 0, %v88
    %v90 = vrot.slane %v85, %v89
    %v91 = vlaneseq
    %v92 = vshrl.u32 %v91, 7
    %v93 = vsub.s32 1, %v92
    %v94 = vrot.slane %v85, %v93
    %v101 = vunpack.c.l.b16 %v81
    %v102 = vunpack.c.h.b16 %v81
    %v103 = vunpack.c.l.b16 %v82
    %v104 = vunpack.c.h.b16 %v82
    %v105 = vunpack.c.l.b16 %v83
    %v106 = vunpack.c.h.b16 %v83
    %v107 = vunpack.c.l.b16 %v84
    %v108 = vunpack.c.h.b16 %v84
    %v109 = vpack.c.b16 %v103, %v101
    %v110 = vpack.c.b16 %v104, %v102
    %v111 = vpack.c.b16 %v107, %v105
    %v112 = vpack.c.b16 %v108, %v106
    %vm117 = vcmask 261120
    %v119 = vsel %vm117, %v78, 0
    %v122 = vsel %vm117, %v79, 0
    %v125 = vsel %vm117, %v80, 0
    %127 = vmatprep.subr.bf16.mxu0 %v110
    %128 = vmatpush1.bf16.msra.mxu0 %v109
    %129 = vmatprep.subr.bf16.mxu0 %v112
    %130 = vmatpush1.bf16.msra.mxu0 %v111
    %131 = vmatprep.subr.bf16.mxu0 0
    %132 = vmatpush1.bf16.msra.mxu0 0
    %133 = vmatprep.subr.bf16.mxu0 0
    %134 = vmatpush1.bf16.msra.mxu0 0
    %135 = vmatprep.subr.bf16.mxu0 0
    %136 = vmatpush1.bf16.msra.mxu0 0
    %137 = vmatprep.subr.bf16.mxu0 0
    %138 = vmatpush1.bf16.msra.mxu0 0
    %139 = vmatprep.subr.bf16.mxu0 0
    %140 = vmatpush1.bf16.msra.mxu0 0
    %141 = vmatprep.subr.bf16.mxu0 0
    %142 = vmatpush1.bf16.msra.mxu0 0
    %143 = vmatprep.subr.bf16.mxu0 0
    %144 = vmatpush1.bf16.msra.mxu0 0
    %145 = vmatprep.subr.bf16.mxu0 0
    %146 = vmatpush1.bf16.msra.mxu0 0
    %147 = vmatprep.subr.bf16.mxu0 0
    %148 = vmatpush1.bf16.msra.mxu0 0
    %149 = vmatprep.subr.bf16.mxu0 0
    %150 = vmatpush1.bf16.msra.mxu0 0
    %151 = vmatprep.subr.bf16.mxu0 0
    %152 = vmatpush1.bf16.msra.mxu0 0
    %153 = vmatprep.subr.bf16.mxu0 0
    %154 = vmatpush1.bf16.msra.mxu0 0
    %155 = vmatprep.subr.bf16.mxu0 0
    %156 = vmatpush1.bf16.msra.mxu0 0
    %157 = vmatprep.subr.bf16.mxu0 0
    %158 = vmatpush1.bf16.msra.mxu0 0
    %159 = vmatprep.mubr.bf16.mxu0 0
    %160 = vmatmul.mubr.bf16.gmra.mrb[0].mxu0 %v119
    %v161 = vpop.f32.mrb[0].mxu0
    %v162 = vadd.f32 %v90, %v161
    %v163 = vpop.f32.mrb[0].mxu0
    %v164 = vpop.f32.mrb[0].mxu0
    %v165 = vadd.f32 %v90, %v164
    %v166 = vpop.f32.mrb[0].mxu0
    %167 = vmatprep.mubr.bf16.mxu0 0
    %168 = vmatmul.mubr.bf16.gmra.mrb[0].mxu0 %v122
    %v169 = vpop.f32.mrb[0].mxu0
    %v170 = vadd.f32 %v90, %v169
    %v171 = vpop.f32.mrb[0].mxu0
    %v172 = vpop.f32.mrb[0].mxu0
    %v173 = vadd.f32 %v90, %v172
    %v174 = vpop.f32.mrb[0].mxu0
    %175 = vmatprep.mubr.bf16.mxu0 0
    %176 = vmatmul.mubr.bf16.gmra.mrb[0].mxu0 %v125
    %v177 = vpop.f32.mrb[0].mxu0
    %v178 = vpop.f32.mrb[0].mxu0
    %v179 = vadd.f32 %v94, %v178
    %v180 = vpop.f32.mrb[0].mxu0
    %v181 = vpop.f32.mrb[0].mxu0
    %v182 = vadd.f32 %v94, %v181
    %183 = vdwg.mxu0
    %v184 = vmul.f32 %v162, 0.17677669
    %v185 = vmul.f32 %v165, 0.17677669
    %v186 = vpack.c.bf16 %v185, %v184
    %v187 = vpack.c.bf16 %v173, %v170
    %v188 = vpack.c.bf16 %v182, %v179
    %v189 = vlaneseq
    %v190 = vand.u32 %v189, 127
    %s191 = sld [smem:[#allocation2]]
    %v192 = vstv %s191
    %vm193 = vcmp.lt.s32.totalorder %v190, %v192
    %195 = vrot.lane.b32.xlu0 %v187, 64
    %v196 = vpop.permute.xlu0 %195
    %v198 = vsel %vm117, %v186, 0
    %v201 = vsel %vm117, %v196, 0
    %203 = vmatprep.subr.bf16.mxu0 0
    %204 = vmatpush1.bf16.xpose.msra.mxu0 %v201
    %205 = vmatprep.subr.bf16.mxu0 0
    %206 = vmatpush1.bf16.xpose.msra.mxu0 0
    %207 = vmatprep.subr.bf16.mxu0 0
    %208 = vmatpush1.bf16.xpose.msra.mxu0 0
    %209 = vmatprep.subr.bf16.mxu0 0
    %210 = vmatpush1.bf16.xpose.msra.mxu0 0
    %211 = vmatprep.subr.bf16.mxu0 0
    %212 = vmatpush1.bf16.xpose.msra.mxu0 0
    %213 = vmatprep.subr.bf16.mxu0 0
    %214 = vmatpush1.bf16.xpose.msra.mxu0 0
    %215 = vmatprep.subr.bf16.mxu0 0
    %216 = vmatpush1.bf16.xpose.msra.mxu0 0
    %217 = vmatprep.subr.bf16.mxu0 0
    %218 = vmatpush1.bf16.xpose.msra.mxu0 0
    %219 = vmatprep.subr.bf16.mxu0 0
    %220 = vmatpush1.bf16.xpose.msra.mxu0 0
    %221 = vmatprep.subr.bf16.mxu0 0
    %222 = vmatpush1.bf16.xpose.msra.mxu0 0
    %223 = vmatprep.subr.bf16.mxu0 0
    %224 = vmatpush1.bf16.xpose.msra.mxu0 0
    %225 = vmatprep.subr.bf16.mxu0 0
    %226 = vmatpush1.bf16.xpose.msra.mxu0 0
    %227 = vmatprep.subr.bf16.mxu0 0
    %228 = vmatpush1.bf16.xpose.msra.mxu0 0
    %229 = vmatprep.subr.bf16.mxu0 0
    %230 = vmatpush1.bf16.xpose.msra.mxu0 0
    %231 = vmatprep.subr.bf16.mxu0 0
    %232 = vmatpush1.bf16.xpose.msra.mxu0 0
    %233 = vmatprep.subr.bf16.mxu0 0
    %234 = vmatpush1.bf16.xpose.msra.mxu0 0
    %235 = vmatprep.mubr.bf16.mxu0 0
    %236 = vmatmul.mubr.bf16.gmra.mrb[0].mxu0 %v198
    %v237 = vpop.f32.mrb[0].mxu0
    %v238 = vadd.f32 0.0, %v237
    %v239 = vpop.f32.mrb[0].mxu0
    %v240 = vpop.f32.mrb[0].mxu0
    %v241 = vpop.f32.mrb[0].mxu0
    %242 = vdwg.mxu0
    %v243 = vsel %vm193, %v238, -1e+09
    %vm244 = vcmask 64512
    %v245 = vsel %vm244, %v243, -inf
    %246 = vmax.xlane.f32.xlu0 %v245
    %v247 = vpop.xlane.xlu0 %246
    %v248 = vsub.f32 %v243, %v247
    %v249 = vmul.f32 %v248, 1.442695
    %v250 = vpow.pop %v249
    %v251 = vsel %vm244, %v250, 0.0
    %252 = vadd.xlane.f32.xlu0 %v251
    %v253 = vpop.xlane.xlu0 %252
    %v254 = vpack.c.bf16 %v250, %v250
    %v256 = vsel %vm244, %v254, 0
    %vm258 = vcmask 1043456
    %v260 = vsel %vm258, %v188, 0
    %262 = vmatprep.subr.bf16.mxu0 0
    %263 = vmatpush1.bf16.msra.mxu0 %v260
    %264 = vmatprep.subr.bf16.mxu0 0
    %265 = vmatpush1.bf16.msra.mxu0 0
    %266 = vmatprep.subr.bf16.mxu0 0
    %267 = vmatpush1.bf16.msra.mxu0 0
    %268 = vmatprep.subr.bf16.mxu0 0
    %269 = vmatpush1.bf16.msra.mxu0 0
    %270 = vmatprep.subr.bf16.mxu0 0
    %271 = vmatpush1.bf16.msra.mxu0 0
    %272 = vmatprep.subr.bf16.mxu0 0
    %273 = vmatpush1.bf16.msra.mxu0 0
    %274 = vmatprep.subr.bf16.mxu0 0
    %275 = vmatpush1.bf16.msra.mxu0 0
    %276 = vmatprep.subr.bf16.mxu0 0
    %277 = vmatpush1.bf16.msra.mxu0 0
    %278 = vmatprep.subr.bf16.mxu0 0
    %279 = vmatpush1.bf16.msra.mxu0 0
    %280 = vmatprep.subr.bf16.mxu0 0
    %281 = vmatpush1.bf16.msra.mxu0 0
    %282 = vmatprep.subr.bf16.mxu0 0
    %283 = vmatpush1.bf16.msra.mxu0 0
    %284 = vmatprep.subr.bf16.mxu0 0
    %285 = vmatpush1.bf16.msra.mxu0 0
    %286 = vmatprep.subr.bf16.mxu0 0
    %287 = vmatpush1.bf16.msra.mxu0 0
    %288 = vmatprep.subr.bf16.mxu0 0
    %289 = vmatpush1.bf16.msra.mxu0 0
    %290 = vmatprep.subr.bf16.mxu0 0
    %291 = vmatpush1.bf16.msra.mxu0 0
    %292 = vmatprep.subr.bf16.mxu0 0
    %293 = vmatpush1.bf16.msra.mxu0 0
    %294 = vmatprep.mubr.bf16.mxu0 0
    %295 = vmatmul.mubr.bf16.gmra.mrb[0].mxu0 %v256
    %v296 = vpop.f32.mrb[0].mxu0
    %v297 = vadd.f32 0.0, %v296
    %v298 = vpop.f32.mrb[0].mxu0
    %v299 = vpop.f32.mrb[0].mxu0
    %v300 = vpop.f32.mrb[0].mxu0
    %301 = vdwg.mxu0
    %v302 = vrcp.pop %v253
    %v303 = vmul.f32 %v297, %v302
    %305 = vrot.lane.b32.xlu0 %v186, 96
    %v306 = vpop.permute.xlu0 %305
    %307 = vrot.lane.b32.xlu0 %v187, 32
    %v308 = vpop.permute.xlu0 %307
    %v310 = vsel %vm117, %v306, 0
    %v313 = vsel %vm117, %v308, 0
    %315 = vmatprep.subr.bf16.mxu0 0
    %316 = vmatpush1.bf16.xpose.msra.mxu0 %v313
    %317 = vmatprep.subr.bf16.mxu0 0
    %318 = vmatpush1.bf16.xpose.msra.mxu0 0
    %319 = vmatprep.subr.bf16.mxu0 0
    %320 = vmatpush1.bf16.xpose.msra.mxu0 0
    %321 = vmatprep.subr.bf16.mxu0 0
    %322 = vmatpush1.bf16.xpose.msra.mxu0 0
    %323 = vmatprep.subr.bf16.mxu0 0
    %324 = vmatpush1.bf16.xpose.msra.mxu0 0
    %325 = vmatprep.subr.bf16.mxu0 0
    %326 = vmatpush1.bf16.xpose.msra.mxu0 0
    %327 = vmatprep.subr.bf16.mxu0 0
    %328 = vmatpush1.bf16.xpose.msra.mxu0 0
    %329 = vmatprep.subr.bf16.mxu0 0
    %330 = vmatpush1.bf16.xpose.msra.mxu0 0
    %331 = vmatprep.subr.bf16.mxu0 0
    %332 = vmatpush1.bf16.xpose.msra.mxu0 0
    %333 = vmatprep.subr.bf16.mxu0 0
    %334 = vmatpush1.bf16.xpose.msra.mxu0 0
    %335 = vmatprep.subr.bf16.mxu0 0
    %336 = vmatpush1.bf16.xpose.msra.mxu0 0
    %337 = vmatprep.subr.bf16.mxu0 0
    %338 = vmatpush1.bf16.xpose.msra.mxu0 0
    %339 = vmatprep.subr.bf16.mxu0 0
    %340 = vmatpush1.bf16.xpose.msra.mxu0 0
    %341 = vmatprep.subr.bf16.mxu0 0
    %342 = vmatpush1.bf16.xpose.msra.mxu0 0
    %343 = vmatprep.subr.bf16.mxu0 0
    %344 = vmatpush1.bf16.xpose.msra.mxu0 0
    %345 = vmatprep.subr.bf16.mxu0 0
    %346 = vmatpush1.bf16.xpose.msra.mxu0 0
    %347 = vmatprep.mubr.bf16.mxu0 0
    %348 = vmatmul.mubr.bf16.gmra.mrb[0].mxu0 %v310
    %v349 = vpop.f32.mrb[0].mxu0
    %v350 = vadd.f32 0.0, %v349
    %v351 = vpop.f32.mrb[0].mxu0
    %v352 = vpop.f32.mrb[0].mxu0
    %v353 = vpop.f32.mrb[0].mxu0
    %354 = vdwg.mxu0
    %v355 = vsel %vm193, %v350, -1e+09
    %v356 = vsel %vm244, %v355, -inf
    %357 = vmax.xlane.f32.xlu0 %v356
    %v358 = vpop.xlane.xlu0 %357
    %v359 = vsub.f32 %v355, %v358
    %v360 = vmul.f32 %v359, 1.442695
    %v361 = vpow.pop %v360
    %v362 = vsel %vm244, %v361, 0.0
    %363 = vadd.xlane.f32.xlu0 %v362
    %v364 = vpop.xlane.xlu0 %363
    %v365 = vpack.c.bf16 %v361, %v361
    %367 = vrot.lane.b32.xlu0 %v188, 96
    %v368 = vpop.permute.xlu0 %367
    %v370 = vsel %vm244, %v365, 0
    %v373 = vsel %vm258, %v368, 0
    %375 = vmatprep.subr.bf16.mxu0 0
    %376 = vmatpush1.bf16.msra.mxu0 %v373
    %377 = vmatprep.subr.bf16.mxu0 0
    %378 = vmatpush1.bf16.msra.mxu0 0
    %379 = vmatprep.subr.bf16.mxu0 0
    %380 = vmatpush1.bf16.msra.mxu0 0
    %381 = vmatprep.subr.bf16.mxu0 0
    %382 = vmatpush1.bf16.msra.mxu0 0
    %383 = vmatprep.subr.bf16.mxu0 0
    %384 = vmatpush1.bf16.msra.mxu0 0
    %385 = vmatprep.subr.bf16.mxu0 0
    %386 = vmatpush1.bf16.msra.mxu0 0
    %387 = vmatprep.subr.bf16.mxu0 0
    %388 = vmatpush1.bf16.msra.mxu0 0
    %389 = vmatprep.subr.bf16.mxu0 0
    %390 = vmatpush1.bf16.msra.mxu0 0
    %391 = vmatprep.subr.bf16.mxu0 0
    %392 = vmatpush1.bf16.msra.mxu0 0
    %393 = vmatprep.subr.bf16.mxu0 0
    %394 = vmatpush1.bf16.msra.mxu0 0
    %395 = vmatprep.subr.bf16.mxu0 0
    %396 = vmatpush1.bf16.msra.mxu0 0
    %397 = vmatprep.subr.bf16.mxu0 0
    %398 = vmatpush1.bf16.msra.mxu0 0
    %399 = vmatprep.subr.bf16.mxu0 0
    %400 = vmatpush1.bf16.msra.mxu0 0
    %401 = vmatprep.subr.bf16.mxu0 0
    %402 = vmatpush1.bf16.msra.mxu0 0
    %403 = vmatprep.subr.bf16.mxu0 0
    %404 = vmatpush1.bf16.msra.mxu0 0
    %405 = vmatprep.subr.bf16.mxu0 0
    %406 = vmatpush1.bf16.msra.mxu0 0
    %407 = vmatprep.mubr.bf16.mxu0 0
    %408 = vmatmul.mubr.bf16.gmra.mrb[0].mxu0 %v370
    %v409 = vpop.f32.mrb[0].mxu0
    %v410 = vadd.f32 0.0, %v409
    %v411 = vpop.f32.mrb[0].mxu0
    %v412 = vpop.f32.mrb[0].mxu0
    %v413 = vpop.f32.mrb[0].mxu0
    %414 = vdwg.mxu0
    %v415 = vrcp.pop %v364
    %v416 = vmul.f32 %v410, %v415
    %418 = vrot.lane.b32.xlu0 %v416, 32
    %v419 = vpop.permute.xlu0 %418
    %v421 = vsel %vm117, %v303, %v419
    %s422 = sld [smem:[#allocation2 + $0x1]]
    %v423 = vstv %s422
    %vm424 = vcmp.lt.s32.totalorder %v190, %v423
    %v425 = vrot.slane %v186, 4
    %v426 = vrot.slane %v187, 4
    %427 = vrot.lane.b32.xlu0 %v426, 64
    %v428 = vpop.permute.xlu0 %427
    %v430 = vsel %vm117, %v425, 0
    %v433 = vsel %vm117, %v428, 0
    %435 = vmatprep.subr.bf16.mxu0 0
    %436 = vmatpush1.bf16.xpose.msra.mxu0 %v433
    %437 = vmatprep.subr.bf16.mxu0 0
    %438 = vmatpush1.bf16.xpose.msra.mxu0 0
    %439 = vmatprep.subr.bf16.mxu0 0
    %440 = vmatpush1.bf16.xpose.msra.mxu0 0
    %441 = vmatprep.subr.bf16.mxu0 0
    %442 = vmatpush1.bf16.xpose.msra.mxu0 0
    %443 = vmatprep.subr.bf16.mxu0 0
    %444 = vmatpush1.bf16.xpose.msra.mxu0 0
    %445 = vmatprep.subr.bf16.mxu0 0
    %446 = vmatpush1.bf16.xpose.msra.mxu0 0
    %447 = vmatprep.subr.bf16.mxu0 0
    %448 = vmatpush1.bf16.xpose.msra.mxu0 0
    %449 = vmatprep.subr.bf16.mxu0 0
    %450 = vmatpush1.bf16.xpose.msra.mxu0 0
    %451 = vmatprep.subr.bf16.mxu0 0
    %452 = vmatpush1.bf16.xpose.msra.mxu0 0
    %453 = vmatprep.subr.bf16.mxu0 0
    %454 = vmatpush1.bf16.xpose.msra.mxu0 0
    %455 = vmatprep.subr.bf16.mxu0 0
    %456 = vmatpush1.bf16.xpose.msra.mxu0 0
    %457 = vmatprep.subr.bf16.mxu0 0
    %458 = vmatpush1.bf16.xpose.msra.mxu0 0
    %459 = vmatprep.subr.bf16.mxu0 0
    %460 = vmatpush1.bf16.xpose.msra.mxu0 0
    %461 = vmatprep.subr.bf16.mxu0 0
    %462 = vmatpush1.bf16.xpose.msra.mxu0 0
    %463 = vmatprep.subr.bf16.mxu0 0
    %464 = vmatpush1.bf16.xpose.msra.mxu0 0
    %465 = vmatprep.subr.bf16.mxu0 0
    %466 = vmatpush1.bf16.xpose.msra.mxu0 0
    %467 = vmatprep.mubr.bf16.mxu0 0
    %468 = vmatmul.mubr.bf16.gmra.mrb[0].mxu0 %v430
    %v469 = vpop.f32.mrb[0].mxu0
    %v470 = vadd.f32 0.0, %v469
    %v471 = vpop.f32.mrb[0].mxu0
    %v472 = vpop.f32.mrb[0].mxu0
    %v473 = vpop.f32.mrb[0].mxu0
    %474 = vdwg.mxu0
    %v475 = vsel %vm424, %v470, -1e+09
    %v476 = vsel %vm244, %v475, -inf
    %477 = vmax.xlane.f32.xlu0 %v476
    %v478 = vpop.xlane.xlu0 %477
    %v479 = vsub.f32 %v475, %v478
    %v480 = vmul.f32 %v479, 1.442695
    %v481 = vpow.pop %v480
    %v482 = vsel %vm244, %v481, 0.0
    %483 = vadd.xlane.f32.xlu0 %v482
    %v484 = vpop.xlane.xlu0 %483
    %v485 = vpack.c.bf16 %v481, %v481
    %v486 = vrot.slane %v188, 4
    %v488 = vsel %vm244, %v485, 0
    %v491 = vsel %vm258, %v486, 0
    %493 = vmatprep.subr.bf16.mxu0 0
    %494 = vmatpush1.bf16.msra.mxu0 %v491
    %495 = vmatprep.subr.bf16.mxu0 0
    %496 = vmatpush1.bf16.msra.mxu0 0
    %497 = vmatprep.subr.bf16.mxu0 0
    %498 = vmatpush1.bf16.msra.mxu0 0
    %499 = vmatprep.subr.bf16.mxu0 0
    %500 = vmatpush1.bf16.msra.mxu0 0
    %501 = vmatprep.subr.bf16.mxu0 0
    %502 = vmatpush1.bf16.msra.mxu0 0
    %503 = vmatprep.subr.bf16.mxu0 0
    %504 = vmatpush1.bf16.msra.mxu0 0
    %505 = vmatprep.subr.bf16.mxu0 0
    %506 = vmatpush1.bf16.msra.mxu0 0
    %507 = vmatprep.subr.bf16.mxu0 0
    %508 = vmatpush1.bf16.msra.mxu0 0
    %509 = vmatprep.subr.bf16.mxu0 0
    %510 = vmatpush1.bf16.msra.mxu0 0
    %511 = vmatprep.subr.bf16.mxu0 0
    %512 = vmatpush1.bf16.msra.mxu0 0
    %513 = vmatprep.subr.bf16.mxu0 0
    %514 = vmatpush1.bf16.msra.mxu0 0
    %515 = vmatprep.subr.bf16.mxu0 0
    %516 = vmatpush1.bf16.msra.mxu0 0
    %517 = vmatprep.subr.bf16.mxu0 0
    %518 = vmatpush1.bf16.msra.mxu0 0
    %519 = vmatprep.subr.bf16.mxu0 0
    %520 = vmatpush1.bf16.msra.mxu0 0
    %521 = vmatprep.subr.bf16.mxu0 0
    %522 = vmatpush1.bf16.msra.mxu0 0
    %523 = vmatprep.subr.bf16.mxu0 0
    %524 = vmatpush1.bf16.msra.mxu0 0
    %525 = vmatprep.mubr.bf16.mxu0 0
    %526 = vmatmul.mubr.bf16.gmra.mrb[0].mxu0 %v488
    %v527 = vpop.f32.mrb[0].mxu0
    %v528 = vadd.f32 0.0, %v527
    %v529 = vpop.f32.mrb[0].mxu0
    %v530 = vpop.f32.mrb[0].mxu0
    %v531 = vpop.f32.mrb[0].mxu0
    %532 = vdwg.mxu0
    %v533 = vrcp.pop %v484
    %v534 = vmul.f32 %v528, %v533
    %535 = vrot.lane.b32.xlu0 %v425, 96
    %v536 = vpop.permute.xlu0 %535
    %537 = vrot.lane.b32.xlu0 %v426, 32
    %v538 = vpop.permute.xlu0 %537
    %v540 = vsel %vm117, %v536, 0
    %v543 = vsel %vm117, %v538, 0
    %545 = vmatprep.subr.bf16.mxu0 0
    %546 = vmatpush1.bf16.xpose.msra.mxu0 %v543
    %547 = vmatprep.subr.bf16.mxu0 0
    %548 = vmatpush1.bf16.xpose.msra.mxu0 0
    %549 = vmatprep.subr.bf16.mxu0 0
    %550 = vmatpush1.bf16.xpose.msra.mxu0 0
    %551 = vmatprep.subr.bf16.mxu0 0
    %552 = vmatpush1.bf16.xpose.msra.mxu0 0
    %553 = vmatprep.subr.bf16.mxu0 0
    %554 = vmatpush1.bf16.xpose.msra.mxu0 0
    %555 = vmatprep.subr.bf16.mxu0 0
    %556 = vmatpush1.bf16.xpose.msra.mxu0 0
    %557 = vmatprep.subr.bf16.mxu0 0
    %558 = vmatpush1.bf16.xpose.msra.mxu0 0
    %559 = vmatprep.subr.bf16.mxu0 0
    %560 = vmatpush1.bf16.xpose.msra.mxu0 0
    %561 = vmatprep.subr.bf16.mxu0 0
    %562 = vmatpush1.bf16.xpose.msra.mxu0 0
    %563 = vmatprep.subr.bf16.mxu0 0
    %564 = vmatpush1.bf16.xpose.msra.mxu0 0
    %565 = vmatprep.subr.bf16.mxu0 0
    %566 = vmatpush1.bf16.xpose.msra.mxu0 0
    %567 = vmatprep.subr.bf16.mxu0 0
    %568 = vmatpush1.bf16.xpose.msra.mxu0 0
    %569 = vmatprep.subr.bf16.mxu0 0
    %570 = vmatpush1.bf16.xpose.msra.mxu0 0
    %571 = vmatprep.subr.bf16.mxu0 0
    %572 = vmatpush1.bf16.xpose.msra.mxu0 0
    %573 = vmatprep.subr.bf16.mxu0 0
    %574 = vmatpush1.bf16.xpose.msra.mxu0 0
    %575 = vmatprep.subr.bf16.mxu0 0
    %576 = vmatpush1.bf16.xpose.msra.mxu0 0
    %577 = vmatprep.mubr.bf16.mxu0 0
    %578 = vmatmul.mubr.bf16.gmra.mrb[0].mxu0 %v540
    %v579 = vpop.f32.mrb[0].mxu0
    %v580 = vadd.f32 0.0, %v579
    %v581 = vpop.f32.mrb[0].mxu0
    %v582 = vpop.f32.mrb[0].mxu0
    %v583 = vpop.f32.mrb[0].mxu0
    %584 = vdwg.mxu0
    %v585 = vsel %vm424, %v580, -1e+09
    %v586 = vsel %vm244, %v585, -inf
    %587 = vmax.xlane.f32.xlu0 %v586
    %v588 = vpop.xlane.xlu0 %587
    %v589 = vsub.f32 %v585, %v588
    %v590 = vmul.f32 %v589, 1.442695
    %v591 = vpow.pop %v590
    %v592 = vsel %vm244, %v591, 0.0
    %593 = vadd.xlane.f32.xlu0 %v592
    %v594 = vpop.xlane.xlu0 %593
    %v595 = vpack.c.bf16 %v591, %v591
    %596 = vrot.lane.b32.xlu0 %v486, 96
    %v597 = vpop.permute.xlu0 %596
    %v599 = vsel %vm244, %v595, 0
    %v602 = vsel %vm258, %v597, 0
    %604 = vmatprep.subr.bf16.mxu0 0
    %605 = vmatpush1.bf16.msra.mxu0 %v602
    %606 = vmatprep.subr.bf16.mxu0 0
    %607 = vmatpush1.bf16.msra.mxu0 0
    %608 = vmatprep.subr.bf16.mxu0 0
    %609 = vmatpush1.bf16.msra.mxu0 0
    %610 = vmatprep.subr.bf16.mxu0 0
    %611 = vmatpush1.bf16.msra.mxu0 0
    %612 = vmatprep.subr.bf16.mxu0 0
    %613 = vmatpush1.bf16.msra.mxu0 0
    %614 = vmatprep.subr.bf16.mxu0 0
    %615 = vmatpush1.bf16.msra.mxu0 0
    %616 = vmatprep.subr.bf16.mxu0 0
    %617 = vmatpush1.bf16.msra.mxu0 0
    %618 = vmatprep.subr.bf16.mxu0 0
    %619 = vmatpush1.bf16.msra.mxu0 0
    %620 = vmatprep.subr.bf16.mxu0 0
    %621 = vmatpush1.bf16.msra.mxu0 0
    %622 = vmatprep.subr.bf16.mxu0 0
    %623 = vmatpush1.bf16.msra.mxu0 0
    %624 = vmatprep.subr.bf16.mxu0 0
    %625 = vmatpush1.bf16.msra.mxu0 0
    %626 = vmatprep.subr.bf16.mxu0 0
    %627 = vmatpush1.bf16.msra.mxu0 0
    %628 = vmatprep.subr.bf16.mxu0 0
    %629 = vmatpush1.bf16.msra.mxu0 0
    %630 = vmatprep.subr.bf16.mxu0 0
    %631 = vmatpush1.bf16.msra.mxu0 0
    %632 = vmatprep.subr.bf16.mxu0 0
    %633 = vmatpush1.bf16.msra.mxu0 0
    %634 = vmatprep.subr.bf16.mxu0 0
    %635 = vmatpush1.bf16.msra.mxu0 0
    %636 = vmatprep.mubr.bf16.mxu0 0
    %637 = vmatmul.mubr.bf16.gmra.mrb[0].mxu0 %v599
    %v638 = vpop.f32.mrb[0].mxu0
    %v639 = vadd.f32 0.0, %v638
    %v640 = vpop.f32.mrb[0].mxu0
    %v641 = vpop.f32.mrb[0].mxu0
    %v642 = vpop.f32.mrb[0].mxu0
    %643 = vdwg.mxu0
    %v644 = vrcp.pop %v594
    %v645 = vmul.f32 %v639, %v644
    %647 = vrot.lane.b32.xlu0 %v645, 32
    %v648 = vpop.permute.xlu0 %647
    %v650 = vsel %vm117, %v534, %v648
    %v651 = vpack.c.bf16 %v650, %v421
    %v652 = vld [vmem:[%s6] sm:$0xf]
    %v653 = vld [vmem:[%s6 + $0x4] sm:$0xf]
    %v654 = vld [vmem:[%s6 + $0x8] sm:$0xf]
    %v655 = vld [vmem:[%s6 + $0xc] sm:$0xf]
    %v656 = vld [vmem:[%s6 + $0x10] sm:$0xf]
    %v657 = vld [vmem:[%s6 + $0x14] sm:$0xf]
    %v658 = vld [vmem:[%s6 + $0x18] sm:$0xf]
    %v659 = vld [vmem:[%s6 + $0x1c] sm:$0xf]
    %v660 = vld [vmem:[%s7] sm:$0x1]
    %v662 = vlaneseq
    %v663 = vshrl.u32 %v662, 7
    %v664 = vsub.s32 0, %v663
    %v665 = vrot.slane %v660, %v664
    %v675 = vunpack.c.l.b16 %v652
    %v676 = vunpack.c.l.b16 %v653
    %v677 = vunpack.c.l.b16 %v654
    %v678 = vunpack.c.l.b16 %v655
    %v679 = vunpack.c.l.b16 %v656
    %v680 = vunpack.c.l.b16 %v657
    %v681 = vunpack.c.l.b16 %v658
    %v682 = vunpack.c.l.b16 %v659
    %v683 = vpack.c.b16 %v676, %v675
    %v684 = vpack.c.b16 %v678, %v677
    %v685 = vpack.c.b16 %v680, %v679
    %v686 = vpack.c.b16 %v682, %v681
    %vm691 = vcmask 523264
    %v693 = vsel %vm691, %v651, 0
    %695 = vmatprep.subr.bf16.mxu0 0
    %696 = vmatpush1.bf16.msra.mxu0 %v683
    %697 = vmatprep.subr.bf16.mxu0 0
    %698 = vmatpush1.bf16.msra.mxu0 %v684
    %699 = vmatprep.subr.bf16.mxu0 0
    %700 = vmatpush1.bf16.msra.mxu0 %v685
    %701 = vmatprep.subr.bf16.mxu0 0
    %702 = vmatpush1.bf16.msra.mxu0 %v686
    %703 = vmatprep.subr.bf16.mxu0 0
    %704 = vmatpush1.bf16.msra.mxu0 0
    %705 = vmatprep.subr.bf16.mxu0 0
    %706 = vmatpush1.bf16.msra.mxu0 0
    %707 = vmatprep.subr.bf16.mxu0 0
    %708 = vmatpush1.bf16.msra.mxu0 0
    %709 = vmatprep.subr.bf16.mxu0 0
    %710 = vmatpush1.bf16.msra.mxu0 0
    %711 = vmatprep.subr.bf16.mxu0 0
    %712 = vmatpush1.bf16.msra.mxu0 0
    %713 = vmatprep.subr.bf16.mxu0 0
    %714 = vmatpush1.bf16.msra.mxu0 0
    %715 = vmatprep.subr.bf16.mxu0 0
    %716 = vmatpush1.bf16.msra.mxu0 0
    %717 = vmatprep.subr.bf16.mxu0 0
    %718 = vmatpush1.bf16.msra.mxu0 0
    %719 = vmatprep.subr.bf16.mxu0 0
    %720 = vmatpush1.bf16.msra.mxu0 0
    %721 = vmatprep.subr.bf16.mxu0 0
    %722 = vmatpush1.bf16.msra.mxu0 0
    %723 = vmatprep.subr.bf16.mxu0 0
    %724 = vmatpush1.bf16.msra.mxu0 0
    %725 = vmatprep.subr.bf16.mxu0 0
    %726 = vmatpush1.bf16.msra.mxu0 0
    %727 = vmatprep.mubr.bf16.mxu0 0
    %728 = vmatmul.mubr.bf16.gmra.mrb[0].mxu0 %v693
    %v729 = vpop.f32.mrb[0].mxu0
    %v730 = vadd.f32 %v665, %v729
    %v731 = vpop.f32.mrb[0].mxu0
    %v732 = vpop.f32.mrb[0].mxu0
    %v733 = vadd.f32 %v665, %v732
    %v734 = vpop.f32.mrb[0].mxu0
    %735 = vdwg.mxu0
    %736 = vst.msk [vmem:[#allocation9] sm:$0xff] %vm117, %v730
    %737 = vst.msk [vmem:[#allocation9 + $0x8] sm:$0xff] %vm117, %v733
    // Predicated region
    $region46: #{tpu_custom_call.1} parent=1 // pred_check
      _
    $region47: #{tpu_custom_call.1} parent=1 // pred_check_branch
      %739 = sbr.rel (0) target = $region49
    $region48: #{tpu_custom_call.1} parent=1 // pred_region
      %s741 = ssub.s32 256, 256
      %742 = vsyncadd [#allocation4], %s741
      %s743 = sshll.u32 [#allocation9], 4
      %s744 = int_to_ptr.vmem [resolvable:$true] %s743
      %749 = dma.vmem_to_hbm [thread:$0]  %s744, 256, %s8, [#allocation4], 128, 128, 8
    $region49: #{tpu_custom_call.1} parent=1 // pred_fallthru
      _
    // Predicated region
    $region50: #{tpu_custom_call.1} parent=1 // pred_check
      _
    $region51: #{tpu_custom_call.1} parent=1 // pred_check_branch
      %751 = sbr.rel (0) target = $region53
    $region52: #{tpu_custom_call.1} parent=1 // pred_region
      %752 = dma.done [#allocation4], 256
    $region53: #{tpu_custom_call.1} parent=1 // pred_fallthru
      _
    %753 = vsyncpa [#allocation3], 1
    %754 = vsyncpa [#allocation8], 1
    %755 = vsyncpa [#allocation4], 1
    %756 = vsyncpa [#allocation5], 1

</llo_original>
